<compile_context>
chip_gen: v5e
topology: v5e:2x2
jax: 0.10.0
libtpu: 0.0.40
codegen_flags: <defaults>
</compile_context>

<pallas_src>
import jax
import jax.numpy as jnp
from jax.experimental import pallas as pl
from jax.experimental.pallas import tpu as pltpu


def _round_up(x, m):
    return (x + m - 1) // m * m


def highway_layout(e_word, lanes=128):
    """Pick (fold, e_pad) so each folded row is lane-dense.

    fold  : number of examples packed per kernel row (contiguous, zero-copy).
    e_pad : per-example feature width after zero-padding (== e_word unless
            e_word is neither a divisor nor a multiple of `lanes`).
    On v6e/v7x, lanes=256 is a tuning knob (fills the 256-deep MXU in one push).
    """
    if e_word % lanes == 0:
        return 1, e_word                      # already lane-dense
    if lanes % e_word == 0:
        return lanes // e_word, e_word        # fold lanes//E examples per row
    return 1, _round_up(e_word, lanes)        # pad E up -> unmasked stores


def prepare_highway_weights(w_proj, b_proj, w_gate, b_gate, *,
                            lanes=128, dtype=jnp.float32):
    """One-time weight prep: transpose, fuse proj|gate, lane-fold / lane-pad.

    Returns (w_folded, b_folded, fold, e_pad) with
      w_folded: [fold*e_pad, 2*fold*e_pad]  block-diagonal fused weight
      b_folded: [1, 2*fold*e_pad]
    For a folded input row [x_0 | ... | x_{fold-1}]:
      y[:, :EF] = [x_0 @ Wp.T | ...]   (proj half)
      y[:, EF:] = [x_0 @ Wg.T | ...]   (gate half)
    Pass dtype=jnp.bfloat16 to halve weight/activation HBM traffic on v6e/v7x
    (kernel keeps f32 accumulation + f32 epilogue).
    """
    E = w_proj.shape[0]
    fold, e_pad = highway_layout(E, lanes)
    ef = fold * e_pad
    wp_t = jnp.asarray(w_proj, dtype).T       # [E_in, E_out]
    wg_t = jnp.asarray(w_gate, dtype).T
    w_folded = jnp.zeros((ef, 2 * ef), dtype)
    for i in range(fold):
        r = i * e_pad
        w_folded = w_folded.at[r:r + E, r:r + E].set(wp_t)
        w_folded = w_folded.at[r:r + E, ef + r:ef + r + E].set(wg_t)
    bp = jnp.zeros((e_pad,), dtype).at[:E].set(jnp.asarray(b_proj, dtype))
    bg = jnp.zeros((e_pad,), dtype).at[:E].set(jnp.asarray(b_gate, dtype))
    b_folded = jnp.concatenate([jnp.tile(bp, fold),
                                jnp.tile(bg, fold)]).reshape(1, 2 * ef)
    return w_folded, b_folded, fold, e_pad


def highway_kernel(x_ref, w_ref, b_ref, o_ref):
    """One batch tile.

    x_ref : [TB, EF]      folded inputs (FOLD examples per lane-dense row)
    w_ref : [EF, 2*EF]    block-diagonal fused (proj | gate) weight, resident
    b_ref : [1, 2*EF]     fused bias, resident
    o_ref : [TB, EF]      folded outputs (same dtype as inputs/weights)
    """
    x = x_ref[...]
    ef = x.shape[-1]
    # Single MXU pass produces both branches. proj lives in lanes [0, EF),
    # gate in lanes [EF, 2EF); both slices are vreg-aligned (EF % 128 == 0).
    y = jnp.dot(x, w_ref[...], preferred_element_type=jnp.float32) + b_ref[...]
    proj = jnp.maximum(y[:, :ef], 0.0)
    gate = jax.nn.sigmoid(y[:, ef:])          # exp routes to the EUP slot
    xf = x.astype(jnp.float32)                # f32 epilogue even for bf16 I/O
    # Highway combine: x + g*(p - x) == g*p + (1-g)*x, one fewer VPU op.
    o_ref[...] = (xf + gate * (proj - xf)).astype(o_ref.dtype)
    # TODO(synk): dropout(prob) omitted — identity at inference; a training path
    # would need pltpu.prng_seed / pltpu.prng_random_bits masking.


def highway_forward(x, w_folded, b_folded, fold, e_pad, *,
                    block_rows=2048, core_parallel=False):
    """x: [batch, 1, e_word]; weights from prepare_highway_weights().

    Output dtype == weight dtype (supply x already in that dtype to avoid an
    extra HBM cast pass). Set core_parallel=True on v7x to shard the batch
    axis across both TensorCores.
    """
    B, one, E = x.shape
    assert one == 1
    ef = fold * e_pad
    assert w_folded.shape == (ef, 2 * ef)
    assert b_folded.shape == (1, 2 * ef)
    dtype = w_folded.dtype
    isz = jnp.dtype(dtype).itemsize
    sub = max(8, 32 // isz)                   # sublane alignment: 8 f32 / 16 bf16

    x2d = x.reshape(B, E)
    if x2d.dtype != dtype:
        # Perf note: this is an extra full pass over the activation in HBM;
        # producers should hand x over already in the compute dtype.
        x2d = x2d.astype(dtype)

    # Pad only what the lane-fold reshape needs (multiple of `fold` rows, and
    # feature dim up to e_pad for awkward E). No sublane padding: partial last
    # grid blocks are handled by Pallas' masked boundary load/store.
    b_pad = _round_up(B, fold)
    if b_pad != B or e_pad != E:
        x2d = jnp.pad(x2d, ((0, b_pad - B), (0, e_pad - E)))
    bf_rows = b_pad // fold
    xf = x2d.reshape(bf_rows, ef)             # zero-copy fold: rows -> lanes

    # Batch tile: large tiles amortize per-grid-step overhead on this mem-bound
    # kernel; clamp so double-buffered x+out tiles + resident weight/bias stay
    # under ~12 MiB (v5e scoped-VMEM default is 16 MiB; v6e/v7x is 32 MiB), so
    # no explicit vmem_limit_bytes is needed.
    w_resident = 2 * (ef * 2 * ef + 2 * ef) * isz
    vmem_budget = 12 * 1024 * 1024
    max_tb = max(sub, (max(vmem_budget - w_resident, 0) // (4 * ef * isz))
                 // sub * sub)
    tb = min(block_rows, max_tb)
    if tb >= bf_rows:
        tb = bf_rows                          # single block over the full row count
    else:
        tb = max(sub, tb - tb % sub)
    grid = (pl.cdiv(bf_rows, tb),)

    cost = pl.CostEstimate(
        flops=2 * bf_rows * ef * (2 * ef),
        transcendentals=bf_rows * ef,
        bytes_accessed=(2 * bf_rows * ef + ef * 2 * ef + 2 * ef) * isz,
    )

    batch_sem = pltpu.CORE_PARALLEL if core_parallel else pltpu.PARALLEL

    out_f = pl.pallas_call(
        highway_kernel,
        # Output dtype follows the compute dtype -> no trailing wrapper cast.
        out_shape=jax.ShapeDtypeStruct((bf_rows, ef), dtype),
        grid_spec=pltpu.PrefetchScalarGridSpec(
            num_scalar_prefetch=0,
            grid=grid,
            in_specs=[
                pl.BlockSpec((tb, ef), lambda i: (i, 0)),      # x: batch-tiled
                # Weight/bias are grid-invariant and stay resident in VMEM.
                # (pipeline_mode=pl.Buffered(1) would also drop their second
                #  pipeline buffer; left off for portability — they are tiny.)
                pl.BlockSpec((ef, 2 * ef), lambda i: (0, 0)),
                pl.BlockSpec((1, 2 * ef), lambda i: (0, 0)),
            ],
            out_specs=pl.BlockSpec((tb, ef), lambda i: (i, 0)),
        ),
        compiler_params=pltpu.CompilerParams(
            dimension_semantics=(batch_sem,)),
        cost_estimate=cost,
    )(xf, w_folded, b_folded)

    out2d = out_f.reshape(b_pad, e_pad)
    if b_pad != B or e_pad != E:
        out2d = out2d[:B, :E]
    return out2d.reshape(B, 1, E)


def highway_ref(x, w_proj, b_proj, w_gate, b_gate):
    """Pure-JAX reference for correctness check."""
    x2d = x.reshape(x.shape[0], x.shape[-1]).astype(jnp.float32)
    proj = jnp.maximum(x2d @ w_proj.T + b_proj, 0.0)
    gate = jax.nn.sigmoid(x2d @ w_gate.T + b_gate)
    out = gate * proj + (1.0 - gate) * x2d
    return out.reshape(x.shape)


if __name__ == "__main__":
    key = jax.random.PRNGKey(0)
    k_x, k_wp, k_bp, k_wg, k_bg, k_x2 = jax.random.split(key, 6)

    # ---- Test 1: e_word=32 (lane-fold 4 -> 128-wide rows), f32, 2-step grid ----
    B, E = 64, 32
    x = jax.random.normal(k_x, (B, 1, E), dtype=jnp.float32)
    w_proj = jax.random.normal(k_wp, (E, E), dtype=jnp.float32) * 0.1
    b_proj = jax.random.normal(k_bp, (E,), dtype=jnp.float32) * 0.1
    w_gate = jax.random.normal(k_wg, (E, E), dtype=jnp.float32) * 0.1
    b_gate = jax.random.normal(k_bg, (E,), dtype=jnp.float32) * 0.1
    ref = highway_ref(x, w_proj, b_proj, w_gate, b_gate)

    w_f, b_f, fold, e_pad = prepare_highway_weights(w_proj, b_proj,
                                                    w_gate, b_gate)
    # block_rows=8 only to exercise a multi-step grid at this tiny demo size;
    # the production default is 2048 folded rows.
    out = jax.block_until_ready(
        highway_forward(x, w_f, b_f, fold, e_pad, block_rows=8))
    assert out.shape == (B, 1, E)
    assert jnp.allclose(out, ref, atol=1e-5, rtol=1e-5), "f32 multi-step mismatch"

    # ---- Test 2: same weights, default (large) batch tile -> single block ----
    out = jax.block_until_ready(highway_forward(x, w_f, b_f, fold, e_pad))
    assert jnp.allclose(out, ref, atol=1e-5, rtol=1e-5), "f32 single-block mismatch"

    # ---- Test 3: bf16 end-to-end (half the HBM traffic), f32 epilogue ----
    w_h, b_h, fold_h, e_pad_h = prepare_highway_weights(
        w_proj, b_proj, w_gate, b_gate, dtype=jnp.bfloat16)
    out16 = jax.block_until_ready(
        highway_forward(x.astype(jnp.bfloat16), w_h, b_h, fold_h, e_pad_h))
    assert out16.dtype == jnp.bfloat16
    assert jnp.allclose(out16.astype(jnp.float32), ref,
                        atol=5e-2, rtol=5e-2), "bf16 mismatch"

    # ---- Test 4: awkward e_word=48 -> lane-padded to 128 (fallback path) ----
    B2, E2 = 16, 48
    x2 = jax.random.normal(k_x2, (B2, 1, E2), dtype=jnp.float32)
    kp = jax.random.split(jax.random.PRNGKey(1), 4)
    w_proj2 = jax.random.normal(kp[0], (E2, E2), dtype=jnp.float32) * 0.1
    b_proj2 = jax.random.normal(kp[1], (E2,), dtype=jnp.float32) * 0.1
    w_gate2 = jax.random.normal(kp[2], (E2, E2), dtype=jnp.float32) * 0.1
    b_gate2 = jax.random.normal(kp[3], (E2,), dtype=jnp.float32) * 0.1
    w_f2, b_f2, fold2, e_pad2 = prepare_highway_weights(
        w_proj2, b_proj2, w_gate2, b_gate2)
    out2 = jax.block_until_ready(
        highway_forward(x2, w_f2, b_f2, fold2, e_pad2))
    ref2 = highway_ref(x2, w_proj2, b_proj2, w_gate2, b_gate2)
    assert out2.shape == (B2, 1, E2)
    assert jnp.allclose(out2, ref2, atol=1e-5, rtol=1e-5), "lane-padded-E mismatch"

    print("KERNEL_OK")
</pallas_src>

<mosaic_0001>
module attributes {stable_mosaic.version = 11 : i64} {
  func.func @highway_kernel(%arg0: i32, %arg1: memref<8x128xf32, #tpu.memory_space<vmem>>, %arg2: memref<128x256xf32, #tpu.memory_space<vmem>>, %arg3: memref<1x256xf32, #tpu.memory_space<vmem>>, %arg4: memref<8x128xf32, #tpu.memory_space<vmem>>) attributes {dimension_semantics = [#tpu.dimension_semantics<parallel>], iteration_bounds = array<i64: 2>, scalar_prefetch = 0 : i64, scratch_operands = 0 : i64, tpu.core_type = #tpu.core_type<tc>, window_params = [{transform_indices = @transform_0, window_bounds = array<i64: 8, 128>}, {pipeline_mode = #tpu.pipeline_mode<synchronous>, transform_indices = @transform_1, window_bounds = array<i64: 128, 256>}, {pipeline_mode = #tpu.pipeline_mode<synchronous>, transform_indices = @transform_2, window_bounds = array<i64: 1, 256>}, {transform_indices = @transform_3, window_bounds = array<i64: 8, 128>}]} {
    %c0 = arith.constant 0 : index
    %c0_0 = arith.constant 0 : index
    %0 = vector.load %arg1[%c0, %c0_0] : memref<8x128xf32, #tpu.memory_space<vmem>>, vector<8x128xf32>
    %c0_1 = arith.constant 0 : index
    %c0_2 = arith.constant 0 : index
    %1 = vector.load %arg2[%c0_1, %c0_2] : memref<128x256xf32, #tpu.memory_space<vmem>>, vector<128x256xf32>
    %cst = arith.constant dense<0.000000e+00> : vector<8x256xf32>
    %2 = tpu.matmul %0, %1, %cst {dimension_numbers = #tpu.dot_dimension_numbers<[1], [0], [0], [1], [0, 0, 1, 1], [], []>} : vector<8x128xf32>, vector<128x256xf32>, vector<8x256xf32> -> vector<8x256xf32>
    %c0_3 = arith.constant 0 : index
    %c0_4 = arith.constant 0 : index
    %3 = vector.load %arg3[%c0_3, %c0_4] : memref<1x256xf32, #tpu.memory_space<vmem>>, vector<1x256xf32>
    %4 = vector.broadcast %3 : vector<1x256xf32> to vector<8x256xf32>
    %5 = arith.addf %2, %4 : vector<8x256xf32>
    %6 = vector.extract_strided_slice %5 {offsets = [0, 0], sizes = [8, 128], strides = [1, 1]} : vector<8x256xf32> to vector<8x128xf32>
    %cst_5 = arith.constant 0.000000e+00 : f32
    %7 = vector.broadcast %cst_5 : f32 to vector<8x128xf32>
    %8 = arith.maximumf %6, %7 : vector<8x128xf32>
    %9 = vector.extract_strided_slice %5 {offsets = [0, 128], sizes = [8, 128], strides = [1, 1]} : vector<8x256xf32> to vector<8x128xf32>
    %10 = arith.negf %9 : vector<8x128xf32>
    %11 = math.exp %10 : vector<8x128xf32>
    %cst_6 = arith.constant 1.000000e+00 : f32
    %12 = vector.broadcast %cst_6 : f32 to vector<8x128xf32>
    %13 = arith.addf %12, %11 : vector<8x128xf32>
    %14 = arith.divf %12, %13 : vector<8x128xf32>
    %15 = arith.subf %8, %0 : vector<8x128xf32>
    %16 = arith.mulf %14, %15 : vector<8x128xf32>
    %17 = arith.addf %0, %16 : vector<8x128xf32>
    %c0_7 = arith.constant 0 : index
    %c0_8 = arith.constant 0 : index
    %18 = vector.load %arg4[%c0_7, %c0_8] : memref<8x128xf32, #tpu.memory_space<vmem>>, vector<8x128xf32>
    tpu.vector_store %arg4[%c0_7, %c0_8], %17 {strides = array<i32>} : memref<8x128xf32, #tpu.memory_space<vmem>>, vector<8x128xf32>,
    return
  }
  func.func @transform_0(%arg0: i32) -> (i32, i32) {
    %c0_i32 = arith.constant 0 : i32
    %c0_i32_0 = arith.constant 0 : i32
    return %arg0, %c0_i32 : i32, i32
  }
  func.func @transform_1(%arg0: i32) -> (i32, i32) {
    %c0_i32 = arith.constant 0 : i32
    %c0_i32_0 = arith.constant 0 : i32
    %c0_i32_1 = arith.constant 0 : i32
    return %c0_i32, %c0_i32_0 : i32, i32
  }
  func.func @transform_2(%arg0: i32) -> (i32, i32) {
    %c0_i32 = arith.constant 0 : i32
    %c0_i32_0 = arith.constant 0 : i32
    %c0_i32_1 = arith.constant 0 : i32
    return %c0_i32, %c0_i32_0 : i32, i32
  }
  func.func @transform_3(%arg0: i32) -> (i32, i32) {
    %c0_i32 = arith.constant 0 : i32
    %c0_i32_0 = arith.constant 0 : i32
    return %arg0, %c0_i32 : i32, i32
  }
}

</mosaic_0001>

<llo_original>
// kernel: tpu_custom_call.1
$region0: #{tpu_custom_call.1}
  #allocation0 [shape = 'u32[]', space=smem, size = 0x4, offset = 0x4, fixed_abs, tag = 'smem constant byte address 0x4 - core index']
  #allocation1 [shape = 'u32[72,128]{1,0:T(1,128)}', space=vmem, size = 0x9000, scoped, tag = 'internal scratch']
  %s0 = inlined_call_operand.hbm [shape: f32[16,128], index: 0, kind: input, shape index: {}]
  %s1 = inlined_call_operand.hbm [shape: f32[128,256], index: 1, kind: input, shape index: {}]
  %s2 = inlined_call_operand.hbm [shape: f32[1,256], index: 2, kind: input, shape index: {}]
  %s3 = inlined_call_operand.hbm [shape: f32[16,128], index: 3, kind: output, shape index: {}]
  %s4 = sld [smem:[#allocation0]]
  $region57: #{tpu_custom_call.1} parent=0
    _
  %s6 = ssub.s32 1, %s4
  %s7 = scalar_select 0, %s6, %s4
  $region1: #{tpu_custom_call.1} parent=0
    #allocation2 [shape = 'u8[8192]{0}', space=vmem, size = 0x2000, scoped, tag = 'input window, operand 0']
    #allocation3 [shape = 's32[2]{0}', space=sflag, size = 0x8, scoped, tag = 'scoped memory for tpu_custom_call.1']
    #allocation4 [shape = 's32[2]{0}', space=sflag, size = 0x8, scoped, tag = 'scoped memory for tpu_custom_call.1']
    #allocation5 [shape = 'u8[131072]{0}', space=vmem, size = 0x20000, scoped, tag = 'input window, operand 1, single buffered']
    #allocation6 [shape = 's32[1]{0}', space=sflag, size = 0x4, scoped, tag = 'scoped memory for tpu_custom_call.1']
    #allocation7 [shape = 'u8[1024]{0}', space=vmem, size = 0x400, scoped, tag = 'input window, operand 2, single buffered']
    #allocation8 [shape = 'u8[8192]{0}', space=vmem, size = 0x2000, scoped, tag = 'output window, operand 0']
    %8 = vsyncpa [#allocation3], 0
    %s9 = scalar_lea.sflag [#allocation3], 1
    %10 = vsyncpa %s9, 0
    %11 = vsyncpa [#allocation6], 0
    %12 = vsyncpa [#allocation4], 0
    %s13 = scalar_lea.sflag [#allocation4], 1
    %14 = vsyncpa %s13, 0
    loop: start=0, step=1, limit=4
    $region2: #{tpu_custom_call.1} parent=1 // loop_pre_header
      _
    $region3: #{tpu_custom_call.1} parent=1 // loop_header
      %s16 = sphi 0, %s20
      %p17 = scmp.ge.s32.totalorder %s16, 4
      %s26 = sphi 0, %s28
      %s29 = sphi 0, %s26
      %s30 = sphi 0, %s29
      %s46 = sphi 0, %s30
      %s50 = sphi 0, %s50
      %s52 = sphi 0, %s50
      %s53 = sphi 0, %s52
      %s67 = sphi 0, %s53
      %s71 = sphi 0, %s71
      %s73 = sphi 0, %s71
      %s74 = sphi 0, %s73
      %s88 = sphi 0, %s74
      %s94 = sphi 0, %s96
      %s97 = sphi 0, %s94
      %s98 = sphi 0, %s97
      %s114 = sphi 0, %s98
    $region4: #{tpu_custom_call.1} parent=1 // loop_header_branch
      %19 = sbr.rel (%p17) target = $region8
    $region5: #{tpu_custom_call.1} parent=1 // loop_body
      %s21 = ssub.s32 %s16, 1
      %s22 = ssub.s32 %s16, 2
      %s23 = sadd.s32 %s16, 1
      %s24 = ssub.s32 %s16, %s23
      %p25 = scmp.eq.s32.totalorder %s24, 0
      %s27 = sadd.s32 %s26, 1
      %s28 = scalar_select %p25, %s26, %s27
      %p31 = pneg %p25
      %p32 = scmp.eq.s32.totalorder %s16, 1
      %p33 = por %p31, %p32
      %p34 = scmp.ne.s32.totalorder %s26, %s29
      %p35 = scmp.eq.s32.totalorder %s16, 0
      %p36 = por %p34, %p35
      %p37 = scmp.ne.s32.totalorder %s26, %s29
      %p38 = scmp.eq.s32.totalorder %s21, 1
      %p39 = por %p37, %p38
      %p40 = scmp.ne.s32.totalorder %s29, %s30
      %p41 = scmp.eq.s32.totalorder %s21, 0
      %p42 = por %p40, %p41
      %p43 = scmp.ne.s32.totalorder %s29, %s30
      %p44 = scmp.eq.s32.totalorder %s22, 1
      %p45 = por %p43, %p44
      %p47 = scmp.ne.s32.totalorder %s30, %s46
      %p48 = scmp.eq.s32.totalorder %s22, 0
      %p49 = por %p47, %p48
      %s51 = sadd.s32 %s50, 1
      %p54 = scmp.eq.s32.totalorder %s16, 1
      %p55 = scmp.ne.s32.totalorder %s50, %s52
      %p56 = scmp.eq.s32.totalorder %s16, 0
      %p57 = por %p55, %p56
      %p58 = scmp.ne.s32.totalorder %s50, %s52
      %p59 = scmp.eq.s32.totalorder %s21, 1
      %p60 = por %p58, %p59
      %p61 = scmp.ne.s32.totalorder %s52, %s53
      %p62 = scmp.eq.s32.totalorder %s21, 0
      %p63 = por %p61, %p62
      %p64 = scmp.ne.s32.totalorder %s52, %s53
      %p65 = scmp.eq.s32.totalorder %s22, 1
      %p66 = por %p64, %p65
      %p68 = scmp.ne.s32.totalorder %s53, %s67
      %p69 = scmp.eq.s32.totalorder %s22, 0
      %p70 = por %p68, %p69
      %s72 = sadd.s32 %s71, 1
      %p75 = scmp.eq.s32.totalorder %s16, 1
      %p76 = scmp.ne.s32.totalorder %s71, %s73
      %p77 = scmp.eq.s32.totalorder %s16, 0
      %p78 = por %p76, %p77
      %p79 = scmp.ne.s32.totalorder %s71, %s73
      %p80 = scmp.eq.s32.totalorder %s21, 1
      %p81 = por %p79, %p80
      %p82 = scmp.ne.s32.totalorder %s73, %s74
      %p83 = scmp.eq.s32.totalorder %s21, 0
      %p84 = por %p82, %p83
      %p85 = scmp.ne.s32.totalorder %s73, %s74
      %p86 = scmp.eq.s32.totalorder %s22, 1
      %p87 = por %p85, %p86
      %p89 = scmp.ne.s32.totalorder %s74, %s88
      %p90 = scmp.eq.s32.totalorder %s22, 0
      %p91 = por %p89, %p90
      %s92 = ssub.s32 %s16, %s23
      %p93 = scmp.eq.s32.totalorder %s92, 0
      %s95 = sadd.s32 %s94, 1
      %s96 = scalar_select %p93, %s94, %s95
      %p99 = pneg %p93
      %p100 = scmp.eq.s32.totalorder %s16, 1
      %p101 = por %p99, %p100
      %p102 = scmp.ne.s32.totalorder %s94, %s97
      %p103 = scmp.eq.s32.totalorder %s16, 0
      %p104 = por %p102, %p103
      %p105 = scmp.ne.s32.totalorder %s94, %s97
      %p106 = scmp.eq.s32.totalorder %s21, 1
      %p107 = por %p105, %p106
      %p108 = scmp.ne.s32.totalorder %s97, %s98
      %p109 = scmp.eq.s32.totalorder %s21, 0
      %p110 = por %p108, %p109
      %p111 = scmp.ne.s32.totalorder %s97, %s98
      %p112 = scmp.eq.s32.totalorder %s22, 1
      %p113 = por %p111, %p112
      %p115 = scmp.ne.s32.totalorder %s98, %s114
      %p116 = scmp.eq.s32.totalorder %s22, 0
      %p117 = por %p115, %p116
      %p118 = scmp.le.s32.totalorder 1, %s16
      %p119 = scmp.lt.s32.totalorder %s16, 3
      %p120 = pnand %p118, %p119
      %p121 = pneg %p120
      // Predicated region
      $region9: #{tpu_custom_call.1} parent=5 // pred_check
        _
      $region10: #{tpu_custom_call.1} parent=5 // pred_check_branch
        %123 = sbr.rel (%p120) target = $region12
      $region11: #{tpu_custom_call.1} parent=5 // pred_region
        %s124 = ssub.s32 %s16, 1
        // Predicated region
        $region13: #{tpu_custom_call.1} parent=11 // pred_check
          %p125 = pneg %p63
        $region14: #{tpu_custom_call.1} parent=11 // pred_check_branch
          %127 = sbr.rel (%p125) target = $region16
        $region15: #{tpu_custom_call.1} parent=11 // pred_region
          %129 = vsyncadd [#allocation6], 0
          %s130 = sshll.u32 %s1, 4
          %s131 = int_to_ptr.hbm [resolvable:$true] %s130
          %s132 = sshll.u32 [#allocation5], 4
          %s133 = int_to_ptr.vmem [resolvable:$true] %s132
          %138 = dma.hbm_to_vmem [thread:$0]  %s131, 4096, %s133, [#allocation6], 256, 256, 16
        $region16: #{tpu_custom_call.1} parent=11 // pred_fallthru
          _
        // Predicated region
        $region17: #{tpu_custom_call.1} parent=11 // pred_check
          %p139 = pneg %p84
        $region18: #{tpu_custom_call.1} parent=11 // pred_check_branch
          %141 = sbr.rel (%p139) target = $region20
        $region19: #{tpu_custom_call.1} parent=11 // pred_region
          %143 = vsyncadd [#allocation6], 0
          %s145 = sshll.u32 %s2, 4
          %s146 = int_to_ptr.hbm [resolvable:$true] %s145
          %s147 = sshll.u32 [#allocation7], 4
          %s148 = int_to_ptr.vmem [resolvable:$true] %s147
          %150 = dma.hbm_to_vmem [thread:$0]  %s146, 32, %s148, [#allocation6]
        $region20: #{tpu_custom_call.1} parent=11 // pred_fallthru
          _
      $region12: #{tpu_custom_call.1} parent=5 // pred_fallthru
        _
      %p151 = scmp.lt.s32.totalorder %s16, 2
      // Predicated region
      $region21: #{tpu_custom_call.1} parent=5 // pred_check
        %p152 = pneg %p151
      $region22: #{tpu_custom_call.1} parent=5 // pred_check_branch
        %154 = sbr.rel (%p152) target = $region24
      $region23: #{tpu_custom_call.1} parent=5 // pred_region
        // Predicated region
        $region25: #{tpu_custom_call.1} parent=23 // pred_check
          %p155 = pneg %p36
        $region26: #{tpu_custom_call.1} parent=23 // pred_check_branch
          %157 = sbr.rel (%p155) target = $region28
        $region27: #{tpu_custom_call.1} parent=23 // pred_region
          %s158 = sand.u32 %s26, 1
          %s159 = scalar_lea.sflag [#allocation3], %s158
          %s160 = sand.u32 %s26, 1
          %s161 = smul.addr %s160, 8
          %s162 = scalar_lea.vmem [#allocation2], %s161
          %164 = vsyncadd %s159, 0
          %s165 = smul.addr %s16, 8
          %s166 = scalar_lea.hbm %s0, %s165
          %s168 = sshll.u32 %s166, 4
          %s169 = int_to_ptr.hbm [resolvable:$true] %s168
          %s170 = sshll.u32 %s162, 4
          %s171 = int_to_ptr.vmem [resolvable:$true] %s170
          %173 = dma.hbm_to_vmem [thread:$0]  %s169, 128, %s171, %s159
        $region28: #{tpu_custom_call.1} parent=23 // pred_fallthru
          _
      $region24: #{tpu_custom_call.1} parent=5 // pred_fallthru
        _
      %p174 = scmp.le.s32.totalorder 1, %s16
      %p175 = scmp.lt.s32.totalorder %s16, 3
      %p176 = pnand %p174, %p175
      %p177 = pneg %p176
      // Predicated region
      $region29: #{tpu_custom_call.1} parent=5 // pred_check
        _
      $region30: #{tpu_custom_call.1} parent=5 // pred_check_branch
        %179 = sbr.rel (%p176) target = $region32
      $region31: #{tpu_custom_call.1} parent=5 // pred_region
        %s180 = ssub.s32 %s16, 1
        %s181 = sand.u32 %s29, 1
        %s182 = scalar_lea.sflag [#allocation3], %s181
        %s183 = sand.u32 %s29, 1
        %s184 = smul.addr %s183, 8
        %s185 = scalar_lea.vmem [#allocation2], %s184
        // Predicated region
        $region33: #{tpu_custom_call.1} parent=31 // pred_check
          %p186 = pneg %p42
        $region34: #{tpu_custom_call.1} parent=31 // pred_check_branch
          %188 = sbr.rel (%p186) target = $region36
        $region35: #{tpu_custom_call.1} parent=31 // pred_region
          %190 = dma.done %s182, 128
        $region36: #{tpu_custom_call.1} parent=31 // pred_fallthru
          _
        // Predicated region
        $region37: #{tpu_custom_call.1} parent=31 // pred_check
          %p191 = pneg %p63
        $region38: #{tpu_custom_call.1} parent=31 // pred_check_branch
          %193 = sbr.rel (%p191) target = $region40
        $region39: #{tpu_custom_call.1} parent=31 // pred_region
          %195 = dma.done [#allocation6], 4096
        $region40: #{tpu_custom_call.1} parent=31 // pred_fallthru
          _
        // Predicated region
        $region41: #{tpu_custom_call.1} parent=31 // pred_check
          %p196 = pneg %p84
        $region42: #{tpu_custom_call.1} parent=31 // pred_check_branch
          %198 = sbr.rel (%p196) target = $region44
        $region43: #{tpu_custom_call.1} parent=31 // pred_region
          %200 = dma.done [#allocation6], 32
        $region44: #{tpu_custom_call.1} parent=31 // pred_fallthru
          _
        %s201 = sand.u32 %s29, 1
        %s202 = scalar_lea.sflag [#allocation3], %s201
        %s203 = sand.u32 %s29, 1
        %s204 = smul.addr %s203, 8
        %s205 = scalar_lea.vmem [#allocation2], %s204
        %p206 = pneg %p42
        %p207 = pneg %p39
        %p208 = pneg %p63
        %p209 = pneg %p60
        %p210 = pneg %p84
        %p211 = pneg %p81
        %p212 = pneg %p110
        %p213 = pneg %p107
        %s214 = sand.u32 %s97, 1
        %s215 = scalar_lea.sflag [#allocation4], %s214
        %s216 = sand.u32 %s97, 1
        %s217 = smul.addr %s216, 8
        %s218 = scalar_lea.vmem [#allocation8], %s217
        %v219 = vld [vmem:[%s185] sm:$0xff]
        %v220 = vld [vmem:[#allocation5] sm:$0xff]
        %v221 = vld [vmem:[#allocation5 + $0x8] sm:$0xff]
        %v222 = vld [vmem:[#allocation5 + $0x10] sm:$0xff]
        %v223 = vld [vmem:[#allocation5 + $0x18] sm:$0xff]
        %v224 = vld [vmem:[#allocation5 + $0x20] sm:$0xff]
        %v225 = vld [vmem:[#allocation5 + $0x28] sm:$0xff]
        %v226 = vld [vmem:[#allocation5 + $0x30] sm:$0xff]
        %v227 = vld [vmem:[#allocation5 + $0x38] sm:$0xff]
        %v228 = vld [vmem:[#allocation5 + $0x40] sm:$0xff]
        %v229 = vld [vmem:[#allocation5 + $0x48] sm:$0xff]
        %v230 = vld [vmem:[#allocation5 + $0x50] sm:$0xff]
        %v231 = vld [vmem:[#allocation5 + $0x58] sm:$0xff]
        %v232 = vld [vmem:[#allocation5 + $0x60] sm:$0xff]
        %v233 = vld [vmem:[#allocation5 + $0x68] sm:$0xff]
        %v234 = vld [vmem:[#allocation5 + $0x70] sm:$0xff]
        %v235 = vld [vmem:[#allocation5 + $0x78] sm:$0xff]
        %v236 = vld [vmem:[#allocation5 + $0x80] sm:$0xff]
        %v237 = vld [vmem:[#allocation5 + $0x88] sm:$0xff]
        %v238 = vld [vmem:[#allocation5 + $0x90] sm:$0xff]
        %v239 = vld [vmem:[#allocation5 + $0x98] sm:$0xff]
        %v240 = vld [vmem:[#allocation5 + $0xa0] sm:$0xff]
        %v241 = vld [vmem:[#allocation5 + $0xa8] sm:$0xff]
        %v242 = vld [vmem:[#allocation5 + $0xb0] sm:$0xff]
        %v243 = vld [vmem:[#allocation5 + $0xb8] sm:$0xff]
        %v244 = vld [vmem:[#allocation5 + $0xc0] sm:$0xff]
        %v245 = vld [vmem:[#allocation5 + $0xc8] sm:$0xff]
        %v246 = vld [vmem:[#allocation5 + $0xd0] sm:$0xff]
        %v247 = vld [vmem:[#allocation5 + $0xd8] sm:$0xff]
        %v248 = vld [vmem:[#allocation5 + $0xe0] sm:$0xff]
        %v249 = vld [vmem:[#allocation5 + $0xe8] sm:$0xff]
        %v250 = vld [vmem:[#allocation5 + $0xf0] sm:$0xff]
        %v251 = vld [vmem:[#allocation5 + $0xf8] sm:$0xff]
        %v252 = vld [vmem:[#allocation7] sm:$0x3]
        %v254 = vperm.slane %v252, 0
        %v255 = vperm.slane %v252, 1
        %258 = vmatpush.msra.mxu0 %v250
        %259 = vmatpush.msra.mxu0 %v248
        %260 = vmatpush.msra.mxu0 %v246
        %261 = vmatpush.msra.mxu0 %v244
        %262 = vmatpush.msra.mxu0 %v242
        %263 = vmatpush.msra.mxu0 %v240
        %264 = vmatpush.msra.mxu0 %v238
        %265 = vmatpush.msra.mxu0 %v236
        %266 = vmatpush.msra.mxu0 %v234
        %267 = vmatpush.msra.mxu0 %v232
        %268 = vmatpush.msra.mxu0 %v230
        %269 = vmatpush.msra.mxu0 %v228
        %270 = vmatpush.msra.mxu0 %v226
        %271 = vmatpush.msra.mxu0 %v224
        %272 = vmatpush.msra.mxu0 %v222
        %273 = vmatpush.msra.mxu0 %v220
        %274 = vmatmul.f32.gmra.mxu0 %v219
        %v275 = vpop.f32.mrf.mxu0
        %v276 = vadd.f32 %v254, %v275
        %277 = vdwg.mxu0
        %278 = vmatpush.msra.mxu0 %v251
        %279 = vmatpush.msra.mxu0 %v249
        %280 = vmatpush.msra.mxu0 %v247
        %281 = vmatpush.msra.mxu0 %v245
        %282 = vmatpush.msra.mxu0 %v243
        %283 = vmatpush.msra.mxu0 %v241
        %284 = vmatpush.msra.mxu0 %v239
        %285 = vmatpush.msra.mxu0 %v237
        %286 = vmatpush.msra.mxu0 %v235
        %287 = vmatpush.msra.mxu0 %v233
        %288 = vmatpush.msra.mxu0 %v231
        %289 = vmatpush.msra.mxu0 %v229
        %290 = vmatpush.msra.mxu0 %v227
        %291 = vmatpush.msra.mxu0 %v225
        %292 = vmatpush.msra.mxu0 %v223
        %293 = vmatpush.msra.mxu0 %v221
        %294 = vmatmul.f32.gmra.mxu0 %v219
        %v295 = vpop.f32.mrf.mxu0
        %v296 = vadd.f32 %v255, %v295
        %297 = vdwg.mxu0
        %v298 = vmax.f32 %v276, 0.0
        %v299 = vxor.u32 %v296, 2147483648
        %v300 = vmul.f32 %v299, 1.442695
        %v301 = vpow.pop %v300
        %v302 = vadd.f32 %v301, 1.0
        %v303 = vrcp.pop %v302
        %v304 = vmul.f32 %v302, %v303
        %v305 = vsub.f32 1.0, %v304
        %v306 = vmul.f32 %v303, %v305
        %v307 = vadd.f32 %v303, %v306
        %vm308 = vweird.f32 %v302
        %vm309 = vweird.f32 %v303
        %vm310 = vmor %vm308, %vm309
        %v311 = vsel %vm310, %v303, %v307
        %v312 = vand.u32 2147483647, %v302
        %vm313 = vcmp.eq.f32.partialorder %v312, 8.507059e+37
        %v314 = vand.u32 %v302, 2147483648
        %v315 = vor.u32 1.1754944e-38, %v314
        %v316 = vsel %vm313, %v315, %v311
        %v317 = vmul.f32 1.0, %v316
        %v318 = vsub.f32 %v298, %v219
        %v319 = vmul.f32 %v317, %v318
        %v320 = vadd.f32 %v219, %v319
        %321 = vst [vmem:[%s218] sm:$0xff] %v320
        %s322 = sand.u32 %s97, 1
        %s323 = scalar_lea.sflag [#allocation4], %s322
        %s324 = sand.u32 %s97, 1
        %s325 = smul.addr %s324, 8
        %s326 = scalar_lea.vmem [#allocation8], %s325
        // Predicated region
        $region45: #{tpu_custom_call.1} parent=31 // pred_check
          %p327 = pneg %p107
        $region46: #{tpu_custom_call.1} parent=31 // pred_check_branch
          %329 = sbr.rel (%p327) target = $region48
        $region47: #{tpu_custom_call.1} parent=31 // pred_region
          %331 = vsyncadd %s323, 0
          %s332 = smul.addr %s21, 8
          %s333 = scalar_lea.hbm %s3, %s332
          %s335 = sshll.u32 %s326, 4
          %s336 = int_to_ptr.vmem [resolvable:$true] %s335
          %s337 = sshll.u32 %s333, 4
          %s338 = int_to_ptr.hbm [resolvable:$true] %s337
          %340 = dma.vmem_to_hbm [thread:$0]  %s336, 128, %s338, %s323
        $region48: #{tpu_custom_call.1} parent=31 // pred_fallthru
          _
      $region32: #{tpu_custom_call.1} parent=5 // pred_fallthru
        _
      %p341 = scmp.le.s32.totalorder 2, %s16
      // Predicated region
      $region49: #{tpu_custom_call.1} parent=5 // pred_check
        %p342 = pneg %p341
      $region50: #{tpu_custom_call.1} parent=5 // pred_check_branch
        %344 = sbr.rel (%p342) target = $region52
      $region51: #{tpu_custom_call.1} parent=5 // pred_region
        %s345 = ssub.s32 %s16, 2
        // Predicated region
        $region53: #{tpu_custom_call.1} parent=51 // pred_check
          %p346 = pneg %p113
        $region54: #{tpu_custom_call.1} parent=51 // pred_check_branch
          %348 = sbr.rel (%p346) target = $region56
        $region55: #{tpu_custom_call.1} parent=51 // pred_region
          %s349 = sand.u32 %s98, 1
          %s350 = scalar_lea.sflag [#allocation4], %s349
          %s351 = sand.u32 %s98, 1
          %s352 = smul.addr %s351, 8
          %s353 = scalar_lea.vmem [#allocation8], %s352
          %355 = dma.done %s350, 128
        $region56: #{tpu_custom_call.1} parent=51 // pred_fallthru
          _
      $region52: #{tpu_custom_call.1} parent=5 // pred_fallthru
        _
    $region6: #{tpu_custom_call.1} parent=1 // loop_footer
      %s20 = sadd.s32 1, %s16
    $region7: #{tpu_custom_call.1} parent=1 // loop_footer_branch
      %15 = sbr.rel target = $region3
    $region8: #{tpu_custom_call.1} parent=1 // loop_exit
      _
    %356 = vsyncpa [#allocation3], 1
    %s357 = scalar_lea.sflag [#allocation3], 1
    %358 = vsyncpa %s357, 1
    %359 = vsyncpa [#allocation6], 1
    %360 = vsyncpa [#allocation4], 1
    %s361 = scalar_lea.sflag [#allocation4], 1
    %362 = vsyncpa %s361, 1

</llo_original>
